<compile_context>
chip_gen: v7x
topology: tpu7x:2x2x1
jax: 0.10.0
libtpu: 0.0.40
codegen_flags: <defaults>
</compile_context>

<pallas_src>
import functools

import jax
import jax.numpy as jnp
from jax.experimental import pallas as pl
from jax.experimental.pallas import tpu as pltpu

BN_EPS = 1e-5
_LANE = 128
_SUBLANE_BF16 = 16          # bf16 vregs pack [16, 128]: align batch tiles to 16 rows
_TILE_B_CAP = 2048


def _round_up(x, m):
    return (x + m - 1) // m * m


def _pad2(a, rows, cols, dtype):
    a = a.astype(dtype)
    return jnp.pad(a, ((0, rows - a.shape[0]), (0, cols - a.shape[1])))


def _vmem_budget_bytes():
    # ~3/4 of physical VMEM (96 MiB on v5e/v6e, 48 MiB on v7x), capped at 100 MiB.
    # Falls back to the conservative v7x-safe number if the query is unavailable.
    try:
        cap = int(pltpu.get_tpu_info().vmem_capacity_bytes)
    except Exception:
        cap = 64 * 1024 * 1024
    return min(cap * 3 // 4, 100 * 1024 * 1024)


def _pick_tile_b(B, Kp, Hp, Op, out_itemsize, budget):
    # Fixed VMEM: (possibly double-buffered) bf16 weights + broadcast rows + slack for
    # the (nb, Hp) f32 partial-stat inputs and compiler temporaries.
    fixed = 2 * (Kp * Hp + Hp * Op) * 2 + 4 * Hp * 4 + 2 * Op * 4 + (2 << 20)
    avail = max(budget - fixed, 2 << 20)
    # Per-batch-row bytes: double-buffered bf16 x tile + output tile, plus in-kernel
    # f32 h intermediate, its bf16 copy and the f32 up-cast of x.
    per_row = 2 * Kp * 2 + 2 * Op * out_itemsize + Hp * 4 + Hp * 2 + Kp * 4
    t = int(min(avail // per_row, _TILE_B_CAP, _round_up(B, _SUBLANE_BF16)))
    return max(_SUBLANE_BF16, t // _SUBLANE_BF16 * _SUBLANE_BF16)


def _invariant_spec(block_shape, index_map):
    # Grid-invariant operand: request single buffering if this JAX version supports
    # per-BlockSpec pipeline_mode (saves VMEM headroom, esp. on v7x's 64 MiB).
    try:
        return pl.BlockSpec(block_shape, index_map, pipeline_mode=pl.Buffered(1))
    except Exception:
        return pl.BlockSpec(block_shape, index_map)


# ---------------- pass 1: per-tile partial BatchNorm statistics of h = x @ W1 --------
def _fc1_stats_kernel(x_ref, w1_ref, sum_ref, sq_ref):
    h = jnp.dot(x_ref[...], w1_ref[...], preferred_element_type=jnp.float32)
    sum_ref[...] = jnp.sum(h, axis=0, keepdims=True)
    sq_ref[...] = jnp.sum(h * h, axis=0, keepdims=True)


# ---------------- pass 2: recompute fc1, fold BN in-kernel, ReLU, fc2 ----------------
def _fused_fwd_kernel(x_ref, w1_ref, psum_ref, psq_ref, gamma_ref, beta_ref,
                      w2_ref, b2_ref, o_ref, *, inv_b):
    # Fold BatchNorm (training-mode batch stats, biased variance) into scale/shift.
    # O(nb*Hp) VPU/XLU/EUP work per tile — negligible — and it keeps the batch grid
    # fully parallel with no standalone XLA glue dispatches between the two kernels.
    mean = jnp.sum(psum_ref[...], axis=0, keepdims=True) * inv_b
    ex2 = jnp.sum(psq_ref[...], axis=0, keepdims=True) * inv_b
    # TODO(synk): E[h^2]-E[h]^2 can cancel for features with |mean| >> std; a shifted /
    # Welford-style accumulation would be more robust for very large batches.
    var = jnp.maximum(ex2 - mean * mean, 0.0)
    scale = gamma_ref[...] * jax.lax.rsqrt(var + BN_EPS)
    shift = beta_ref[...] - mean * scale

    # Recompute h instead of round-tripping it through HBM (saves 2*Bp*Hp*2 bytes of
    # traffic for Bp*Kp*2 extra reads + one more MXU pass; also makes the normalized
    # data exactly consistent with the f32 statistics from pass 1).
    h = jnp.dot(x_ref[...], w1_ref[...], preferred_element_type=jnp.float32)
    h = jnp.maximum(h * scale + shift, 0.0)
    y = jnp.dot(h.astype(w2_ref.dtype), w2_ref[...],
                preferred_element_type=jnp.float32)
    o_ref[...] = (y + b2_ref[...]).astype(o_ref.dtype)


def projection_head(x, w1, gamma, beta, w2, b2):
    """x: (B, in); w1: (in, hidden); gamma/beta: (hidden,); w2: (hidden, out); b2: (out,)."""
    B, K = x.shape
    H = w1.shape[1]
    OUT = w2.shape[1]

    Kp = _round_up(K, _LANE)
    Hp = _round_up(H, _LANE)
    Op = _round_up(OUT, _LANE)

    out_dtype = x.dtype
    out_itemsize = jnp.dtype(out_dtype).itemsize
    budget = _vmem_budget_bytes()
    tile_b = _pick_tile_b(B, Kp, Hp, Op, out_itemsize, budget)
    Bp = _round_up(B, tile_b)
    nb = Bp // tile_b

    # bf16 MXU operands (f32 accumulation in-kernel); zero-padded, lane-dense shapes.
    x_p = _pad2(x, Bp, Kp, jnp.bfloat16)
    w1_p = _pad2(w1, Kp, Hp, jnp.bfloat16)
    w2_p = _pad2(w2, Hp, Op, jnp.bfloat16)
    gamma_p = _pad2(gamma.reshape(1, -1), 1, Hp, jnp.float32)
    beta_p = _pad2(beta.reshape(1, -1), 1, Hp, jnp.float32)
    b2_p = _pad2(b2.reshape(1, -1), 1, Op, jnp.float32)

    # ---- pass 1: per-tile partial sum / sum-of-squares (megacore-shardable) ----
    cost1 = pl.CostEstimate(
        flops=2 * Bp * Kp * Hp + 3 * Bp * Hp,
        transcendentals=0,
        bytes_accessed=x_p.size * 2 + w1_p.size * 2 + 2 * nb * Hp * 4)
    h_psum, h_psq = pl.pallas_call(
        _fc1_stats_kernel,
        grid=(nb,),
        in_specs=[
            pl.BlockSpec((tile_b, Kp), lambda b: (b, 0)),
            _invariant_spec((Kp, Hp), lambda b: (0, 0)),
        ],
        out_specs=[
            pl.BlockSpec((1, Hp), lambda b: (b, 0)),
            pl.BlockSpec((1, Hp), lambda b: (b, 0)),
        ],
        out_shape=[
            jax.ShapeDtypeStruct((nb, Hp), jnp.float32),
            jax.ShapeDtypeStruct((nb, Hp), jnp.float32),
        ],
        compiler_params=pltpu.CompilerParams(
            dimension_semantics=("parallel",),
            vmem_limit_bytes=budget),
        cost_estimate=cost1,
    )(x_p, w1_p)

    # ---- pass 2: fused fc1-recompute + BN fold + ReLU + fc2 (+bias) ----
    cost2 = pl.CostEstimate(
        flops=2 * Bp * Kp * Hp + 2 * Bp * Hp * Op + 5 * Bp * Hp,
        transcendentals=nb * Hp,
        bytes_accessed=(x_p.size * 2 + w1_p.size * 2 + w2_p.size * 2
                        + 2 * nb * Hp * 4 + Bp * Op * out_itemsize))
    kernel2 = functools.partial(_fused_fwd_kernel, inv_b=1.0 / float(B))
    y_p = pl.pallas_call(
        kernel2,
        grid=(nb,),
        in_specs=[
            pl.BlockSpec((tile_b, Kp), lambda b: (b, 0)),
            _invariant_spec((Kp, Hp), lambda b: (0, 0)),
            _invariant_spec((nb, Hp), lambda b: (0, 0)),
            _invariant_spec((nb, Hp), lambda b: (0, 0)),
            _invariant_spec((1, Hp), lambda b: (0, 0)),
            _invariant_spec((1, Hp), lambda b: (0, 0)),
            _invariant_spec((Hp, Op), lambda b: (0, 0)),
            _invariant_spec((1, Op), lambda b: (0, 0)),
        ],
        out_specs=pl.BlockSpec((tile_b, Op), lambda b: (b, 0)),
        out_shape=jax.ShapeDtypeStruct((Bp, Op), out_dtype),
        compiler_params=pltpu.CompilerParams(
            dimension_semantics=("parallel",),
            vmem_limit_bytes=budget),
        cost_estimate=cost2,
    )(x_p, w1_p, h_psum, h_psq, gamma_p, beta_p, w2_p, b2_p)

    return y_p[:B, :OUT]


# TODO(synk): BatchNorm running_mean/running_var buffer updates (a training-time side
# effect) are not produced; only the forward output is computed.


def _reference(x, w1, gamma, beta, w2, b2):
    h = x @ w1
    mean = jnp.mean(h, axis=0, keepdims=True)
    var = jnp.mean((h - mean) ** 2, axis=0, keepdims=True)
    h = (h - mean) * jax.lax.rsqrt(var + BN_EPS) * gamma.reshape(1, -1) + beta.reshape(1, -1)
    h = jnp.maximum(h, 0.0)
    return h @ w2 + b2.reshape(1, -1)


if __name__ == "__main__":
    B, in_features, hidden_features, out_features = 8, 32, 64, 16

    key = jax.random.PRNGKey(0)
    kx, k1, k2, kb = jax.random.split(key, 4)

    x = jax.random.normal(kx, (B, in_features), dtype=jnp.float32)

    bound1 = 1.0 / jnp.sqrt(in_features)
    w1 = jax.random.uniform(k1, (in_features, hidden_features),
                            minval=-bound1, maxval=bound1, dtype=jnp.float32)
    gamma = jnp.ones((hidden_features,), dtype=jnp.float32)   # BatchNorm weight init
    beta = jnp.zeros((hidden_features,), dtype=jnp.float32)   # BatchNorm bias init

    bound2 = 1.0 / jnp.sqrt(hidden_features)
    w2 = jax.random.uniform(k2, (hidden_features, out_features),
                            minval=-bound2, maxval=bound2, dtype=jnp.float32)
    b2 = jax.random.uniform(kb, (out_features,),
                            minval=-bound2, maxval=bound2, dtype=jnp.float32)

    y = jax.jit(projection_head)(x, w1, gamma, beta, w2, b2)
    y = jax.block_until_ready(y)
    assert y.shape == (B, out_features)
    assert y.dtype == x.dtype

    # Reference with bf16-cast operands (kernel feeds the MXU bf16, accumulates in f32).
    bf = lambda a: a.astype(jnp.bfloat16).astype(jnp.float32)
    y_ref = _reference(bf(x), bf(w1), gamma, beta, bf(w2), b2)
    assert jnp.allclose(y, y_ref, atol=5e-2, rtol=5e-2)

    print("KERNEL_OK")
</pallas_src>

<mosaic_0001>
module attributes {stable_mosaic.version = 11 : i64} {
  func.func @_fc1_stats_kernel(%arg0: i32, %arg1: memref<16x128xbf16, #tpu.memory_space<vmem>>, %arg2: memref<128x128xbf16, #tpu.memory_space<vmem>>, %arg3: memref<1x128xf32, #tpu.memory_space<vmem>>, %arg4: memref<1x128xf32, #tpu.memory_space<vmem>>) attributes {dimension_semantics = [#tpu.dimension_semantics<parallel>], iteration_bounds = array<i64: 1>, scalar_prefetch = 0 : i64, scratch_operands = 0 : i64, tpu.core_type = #tpu.core_type<tc>, window_params = [{transform_indices = @transform_0, window_bounds = array<i64: 16, 128>}, {pipeline_mode = #tpu.pipeline_mode<synchronous>, transform_indices = @transform_1, window_bounds = array<i64: 128, 128>}, {transform_indices = @transform_2, window_bounds = array<i64: 1, 128>}, {transform_indices = @transform_3, window_bounds = array<i64: 1, 128>}]} {
    %c0 = arith.constant 0 : index
    %c0_0 = arith.constant 0 : index
    %0 = vector.load %arg1[%c0, %c0_0] : memref<16x128xbf16, #tpu.memory_space<vmem>>, vector<16x128xbf16>
    %c0_1 = arith.constant 0 : index
    %c0_2 = arith.constant 0 : index
    %1 = vector.load %arg2[%c0_1, %c0_2] : memref<128x128xbf16, #tpu.memory_space<vmem>>, vector<128x128xbf16>
    %cst = arith.constant dense<0.000000e+00> : vector<16x128xf32>
    %2 = tpu.matmul %0, %1, %cst {dimension_numbers = #tpu.dot_dimension_numbers<[1], [0], [0], [1], [0, 0, 1, 1], [], []>} : vector<16x128xbf16>, vector<128x128xbf16>, vector<16x128xf32> -> vector<16x128xf32>
    %cst_3 = arith.constant dense<0.000000e+00> : vector<128xf32>
    %3 = vector.multi_reduction <add>, %2, %cst_3 [0] : vector<16x128xf32> to vector<128xf32>
    %4 = vector.shape_cast %3 : vector<128xf32> to vector<1x128xf32>
    %c0_4 = arith.constant 0 : index
    %c0_5 = arith.constant 0 : index
    %5 = vector.load %arg3[%c0_4, %c0_5] : memref<1x128xf32, #tpu.memory_space<vmem>>, vector<1x128xf32>
    tpu.vector_store %arg3[%c0_4, %c0_5], %4 {strides = array<i32>} : memref<1x128xf32, #tpu.memory_space<vmem>>, vector<1x128xf32>,
    %6 = arith.mulf %2, %2 : vector<16x128xf32>
    %cst_6 = arith.constant dense<0.000000e+00> : vector<128xf32>
    %7 = vector.multi_reduction <add>, %6, %cst_6 [0] : vector<16x128xf32> to vector<128xf32>
    %8 = vector.shape_cast %7 : vector<128xf32> to vector<1x128xf32>
    %c0_7 = arith.constant 0 : index
    %c0_8 = arith.constant 0 : index
    %9 = vector.load %arg4[%c0_7, %c0_8] : memref<1x128xf32, #tpu.memory_space<vmem>>, vector<1x128xf32>
    tpu.vector_store %arg4[%c0_7, %c0_8], %8 {strides = array<i32>} : memref<1x128xf32, #tpu.memory_space<vmem>>, vector<1x128xf32>,
    return
  }
  func.func @transform_0(%arg0: i32) -> (i32, i32) {
    %c0_i32 = arith.constant 0 : i32
    %c0_i32_0 = arith.constant 0 : i32
    return %arg0, %c0_i32 : i32, i32
  }
  func.func @transform_1(%arg0: i32) -> (i32, i32) {
    %c0_i32 = arith.constant 0 : i32
    %c0_i32_0 = arith.constant 0 : i32
    %c0_i32_1 = arith.constant 0 : i32
    return %c0_i32, %c0_i32_0 : i32, i32
  }
  func.func @transform_2(%arg0: i32) -> (i32, i32) {
    %c0_i32 = arith.constant 0 : i32
    %c0_i32_0 = arith.constant 0 : i32
    return %arg0, %c0_i32 : i32, i32
  }
  func.func @transform_3(%arg0: i32) -> (i32, i32) {
    %c0_i32 = arith.constant 0 : i32
    %c0_i32_0 = arith.constant 0 : i32
    return %arg0, %c0_i32 : i32, i32
  }
}

module attributes {stable_mosaic.version = 11 : i64} {
  func.func @_fused_fwd_kernel(%arg0: i32, %arg1: memref<16x128xbf16, #tpu.memory_space<vmem>>, %arg2: memref<128x128xbf16, #tpu.memory_space<vmem>>, %arg3: memref<1x128xf32, #tpu.memory_space<vmem>>, %arg4: memref<1x128xf32, #tpu.memory_space<vmem>>, %arg5: memref<1x128xf32, #tpu.memory_space<vmem>>, %arg6: memref<1x128xf32, #tpu.memory_space<vmem>>, %arg7: memref<128x128xbf16, #tpu.memory_space<vmem>>, %arg8: memref<1x128xf32, #tpu.memory_space<vmem>>, %arg9: memref<16x128xf32, #tpu.memory_space<vmem>>) attributes {dimension_semantics = [#tpu.dimension_semantics<parallel>], iteration_bounds = array<i64: 1>, scalar_prefetch = 0 : i64, scratch_operands = 0 : i64, tpu.core_type = #tpu.core_type<tc>, window_params = [{transform_indices = @transform_0, window_bounds = array<i64: 16, 128>}, {pipeline_mode = #tpu.pipeline_mode<synchronous>, transform_indices = @transform_1, window_bounds = array<i64: 128, 128>}, {pipeline_mode = #tpu.pipeline_mode<synchronous>, transform_indices = @transform_2, window_bounds = array<i64: 1, 128>}, {pipeline_mode = #tpu.pipeline_mode<synchronous>, transform_indices = @transform_3, window_bounds = array<i64: 1, 128>}, {pipeline_mode = #tpu.pipeline_mode<synchronous>, transform_indices = @transform_4, window_bounds = array<i64: 1, 128>}, {pipeline_mode = #tpu.pipeline_mode<synchronous>, transform_indices = @transform_5, window_bounds = array<i64: 1, 128>}, {pipeline_mode = #tpu.pipeline_mode<synchronous>, transform_indices = @transform_6, window_bounds = array<i64: 128, 128>}, {pipeline_mode = #tpu.pipeline_mode<synchronous>, transform_indices = @transform_7, window_bounds = array<i64: 1, 128>}, {transform_indices = @transform_8, window_bounds = array<i64: 16, 128>}]} {
    %c0 = arith.constant 0 : index
    %c0_0 = arith.constant 0 : index
    %0 = vector.load %arg3[%c0, %c0_0] : memref<1x128xf32, #tpu.memory_space<vmem>>, vector<1x128xf32>
    %cst = arith.constant dense<0.000000e+00> : vector<128xf32>
    %1 = vector.multi_reduction <add>, %0, %cst [0] : vector<1x128xf32> to vector<128xf32>
    %2 = vector.shape_cast %1 : vector<128xf32> to vector<1x128xf32>
    %cst_1 = arith.constant 1.250000e-01 : f32
    %3 = vector.broadcast %cst_1 : f32 to vector<1x128xf32>
    %4 = arith.mulf %2, %3 : vector<1x128xf32>
    %c0_2 = arith.constant 0 : index
    %c0_3 = arith.constant 0 : index
    %5 = vector.load %arg4[%c0_2, %c0_3] : memref<1x128xf32, #tpu.memory_space<vmem>>, vector<1x128xf32>
    %cst_4 = arith.constant dense<0.000000e+00> : vector<128xf32>
    %6 = vector.multi_reduction <add>, %5, %cst_4 [0] : vector<1x128xf32> to vector<128xf32>
    %7 = vector.shape_cast %6 : vector<128xf32> to vector<1x128xf32>
    %cst_5 = arith.constant 1.250000e-01 : f32
    %8 = vector.broadcast %cst_5 : f32 to vector<1x128xf32>
    %9 = arith.mulf %7, %8 : vector<1x128xf32>
    %10 = arith.mulf %4, %4 : vector<1x128xf32>
    %11 = arith.subf %9, %10 : vector<1x128xf32>
    %cst_6 = arith.constant 0.000000e+00 : f32
    %12 = vector.broadcast %cst_6 : f32 to vector<1x128xf32>
    %13 = arith.maximumf %11, %12 : vector<1x128xf32>
    %c0_7 = arith.constant 0 : index
    %c0_8 = arith.constant 0 : index
    %14 = vector.load %arg5[%c0_7, %c0_8] : memref<1x128xf32, #tpu.memory_space<vmem>>, vector<1x128xf32>
    %cst_9 = arith.constant 9.99999974E-6 : f32
    %15 = vector.broadcast %cst_9 : f32 to vector<1x128xf32>
    %16 = arith.addf %13, %15 : vector<1x128xf32>
    %17 = math.rsqrt %16 : vector<1x128xf32>
    %18 = arith.mulf %14, %17 : vector<1x128xf32>
    %c0_10 = arith.constant 0 : index
    %c0_11 = arith.constant 0 : index
    %19 = vector.load %arg6[%c0_10, %c0_11] : memref<1x128xf32, #tpu.memory_space<vmem>>, vector<1x128xf32>
    %20 = arith.mulf %4, %18 : vector<1x128xf32>
    %21 = arith.subf %19, %20 : vector<1x128xf32>
    %c0_12 = arith.constant 0 : index
    %c0_13 = arith.constant 0 : index
    %22 = vector.load %arg1[%c0_12, %c0_13] : memref<16x128xbf16, #tpu.memory_space<vmem>>, vector<16x128xbf16>
    %c0_14 = arith.constant 0 : index
    %c0_15 = arith.constant 0 : index
    %23 = vector.load %arg2[%c0_14, %c0_15] : memref<128x128xbf16, #tpu.memory_space<vmem>>, vector<128x128xbf16>
    %cst_16 = arith.constant dense<0.000000e+00> : vector<16x128xf32>
    %24 = tpu.matmul %22, %23, %cst_16 {dimension_numbers = #tpu.dot_dimension_numbers<[1], [0], [0], [1], [0, 0, 1, 1], [], []>} : vector<16x128xbf16>, vector<128x128xbf16>, vector<16x128xf32> -> vector<16x128xf32>
    %25 = vector.broadcast %18 : vector<1x128xf32> to vector<16x128xf32>
    %26 = arith.mulf %24, %25 : vector<16x128xf32>
    %27 = vector.broadcast %21 : vector<1x128xf32> to vector<16x128xf32>
    %28 = arith.addf %26, %27 : vector<16x128xf32>
    %cst_17 = arith.constant 0.000000e+00 : f32
    %29 = vector.broadcast %cst_17 : f32 to vector<16x128xf32>
    %30 = arith.maximumf %28, %29 : vector<16x128xf32>
    %31 = arith.truncf %30 : vector<16x128xf32> to vector<16x128xbf16>
    %c0_18 = arith.constant 0 : index
    %c0_19 = arith.constant 0 : index
    %32 = vector.load %arg7[%c0_18, %c0_19] : memref<128x128xbf16, #tpu.memory_space<vmem>>, vector<128x128xbf16>
    %cst_20 = arith.constant dense<0.000000e+00> : vector<16x128xf32>
    %33 = tpu.matmul %31, %32, %cst_20 {dimension_numbers = #tpu.dot_dimension_numbers<[1], [0], [0], [1], [0, 0, 1, 1], [], []>} : vector<16x128xbf16>, vector<128x128xbf16>, vector<16x128xf32> -> vector<16x128xf32>
    %c0_21 = arith.constant 0 : index
    %c0_22 = arith.constant 0 : index
    %34 = vector.load %arg8[%c0_21, %c0_22] : memref<1x128xf32, #tpu.memory_space<vmem>>, vector<1x128xf32>
    %35 = vector.broadcast %34 : vector<1x128xf32> to vector<16x128xf32>
    %36 = arith.addf %33, %35 : vector<16x128xf32>
    %c0_23 = arith.constant 0 : index
    %c0_24 = arith.constant 0 : index
    %37 = vector.load %arg9[%c0_23, %c0_24] : memref<16x128xf32, #tpu.memory_space<vmem>>, vector<16x128xf32>
    tpu.vector_store %arg9[%c0_23, %c0_24], %36 {strides = array<i32>} : memref<16x128xf32, #tpu.memory_space<vmem>>, vector<16x128xf32>,
    return
  }
  func.func @transform_0(%arg0: i32) -> (i32, i32) {
    %c0_i32 = arith.constant 0 : i32
    %c0_i32_0 = arith.constant 0 : i32
    return %arg0, %c0_i32 : i32, i32
  }
  func.func @transform_1(%arg0: i32) -> (i32, i32) {
    %c0_i32 = arith.constant 0 : i32
    %c0_i32_0 = arith.constant 0 : i32
    %c0_i32_1 = arith.constant 0 : i32
    return %c0_i32, %c0_i32_0 : i32, i32
  }
  func.func @transform_2(%arg0: i32) -> (i32, i32) {
    %c0_i32 = arith.constant 0 : i32
    %c0_i32_0 = arith.constant 0 : i32
    %c0_i32_1 = arith.constant 0 : i32
    return %c0_i32, %c0_i32_0 : i32, i32
  }
  func.func @transform_3(%arg0: i32) -> (i32, i32) {
    %c0_i32 = arith.constant 0 : i32
    %c0_i32_0 = arith.constant 0 : i32
    %c0_i32_1 = arith.constant 0 : i32
    return %c0_i32, %c0_i32_0 : i32, i32
  }
  func.func @transform_4(%arg0: i32) -> (i32, i32) {
    %c0_i32 = arith.constant 0 : i32
    %c0_i32_0 = arith.constant 0 : i32
    %c0_i32_1 = arith.constant 0 : i32
    return %c0_i32, %c0_i32_0 : i32, i32
  }
  func.func @transform_5(%arg0: i32) -> (i32, i32) {
    %c0_i32 = arith.constant 0 : i32
    %c0_i32_0 = arith.constant 0 : i32
    %c0_i32_1 = arith.constant 0 : i32
    return %c0_i32, %c0_i32_0 : i32, i32
  }
  func.func @transform_6(%arg0: i32) -> (i32, i32) {
    %c0_i32 = arith.constant 0 : i32
    %c0_i32_0 = arith.constant 0 : i32
    %c0_i32_1 = arith.constant 0 : i32
    return %c0_i32, %c0_i32_0 : i32, i32
  }
  func.func @transform_7(%arg0: i32) -> (i32, i32) {
    %c0_i32 = arith.constant 0 : i32
    %c0_i32_0 = arith.constant 0 : i32
    %c0_i32_1 = arith.constant 0 : i32
    return %c0_i32, %c0_i32_0 : i32, i32
  }
  func.func @transform_8(%arg0: i32) -> (i32, i32) {
    %c0_i32 = arith.constant 0 : i32
    %c0_i32_0 = arith.constant 0 : i32
    return %arg0, %c0_i32 : i32, i32
  }
}

</mosaic_0001>

<llo_original>
// kernel: projection_head.2
$region0: #{projection_head.2}
  #allocation0 [shape = 'u32[]', space=smem, size = 0x4, offset = 0x4, fixed_abs, tag = 'smem constant byte address 0x4 - core index']
  #allocation1 [shape = 'u32[144,128]{1,0:T(1,128)}', space=vmem, size = 0x12000, scoped, tag = 'internal scratch']
  %s0 = inlined_call_operand.vmem [shape: bf16[16,128], index: 0, kind: input, shape index: {}]
  %s1 = inlined_call_operand.vmem [shape: bf16[128,128], index: 1, kind: input, shape index: {}]
  %s2 = inlined_call_operand.vmem [shape: f32[1,128], index: 2, kind: output, shape index: {0}]
  %s3 = inlined_call_operand.vmem [shape: f32[1,128], index: 3, kind: output, shape index: {1}]
  %4 = xla_tuple %s2, %s3
  %s5 = sld [smem:[#allocation0]]
  $region26: #{projection_head.2} parent=0
    _
  %s7 = ssub.s32 1, %s5
  %s8 = scalar_select 0, %s7, %s5
  // Predicated region
  $region2: #{projection_head.2} parent=0 // pred_check
    _
  $region3: #{projection_head.2} parent=0 // pred_check_branch
    %10 = sbr.rel (0) target = $region5
  $region4: #{projection_head.2} parent=0 // pred_region
    _
  $region5: #{projection_head.2} parent=0 // pred_fallthru
    _
  // Predicated region
  $region6: #{projection_head.2} parent=0 // pred_check
    _
  $region7: #{projection_head.2} parent=0 // pred_check_branch
    %12 = sbr.rel (0) target = $region9
  $region8: #{projection_head.2} parent=0 // pred_region
    _
  $region9: #{projection_head.2} parent=0 // pred_fallthru
    _
  %v14 = vld [vmem:[%s0] sm:$0xf]
  %v15 = vld [vmem:[%s0 + $0x4] sm:$0xf]
  %v16 = vld [vmem:[%s1] sm:$0xf]
  %v17 = vld [vmem:[%s1 + $0x4] sm:$0xf]
  %v18 = vld [vmem:[%s1 + $0x8] sm:$0xf]
  %v19 = vld [vmem:[%s1 + $0xc] sm:$0xf]
  %v20 = vld [vmem:[%s1 + $0x10] sm:$0xf]
  %v21 = vld [vmem:[%s1 + $0x14] sm:$0xf]
  %v22 = vld [vmem:[%s1 + $0x18] sm:$0xf]
  %v23 = vld [vmem:[%s1 + $0x1c] sm:$0xf]
  %v24 = vld [vmem:[%s1 + $0x20] sm:$0xf]
  %v25 = vld [vmem:[%s1 + $0x24] sm:$0xf]
  %v26 = vld [vmem:[%s1 + $0x28] sm:$0xf]
  %v27 = vld [vmem:[%s1 + $0x2c] sm:$0xf]
  %v28 = vld [vmem:[%s1 + $0x30] sm:$0xf]
  %v29 = vld [vmem:[%s1 + $0x34] sm:$0xf]
  %v30 = vld [vmem:[%s1 + $0x38] sm:$0xf]
  %v31 = vld [vmem:[%s1 + $0x3c] sm:$0xf]
  %v34 = vunpack.c.l.b16 %v14
  %v35 = vunpack.c.l.b16 %v15
  %v36 = vpack.c.b16 %v35, %v34
  %v54 = vunpack.c.l.b16 %v16
  %v55 = vunpack.c.l.b16 %v17
  %v56 = vunpack.c.l.b16 %v18
  %v57 = vunpack.c.l.b16 %v19
  %v58 = vunpack.c.l.b16 %v20
  %v59 = vunpack.c.l.b16 %v21
  %v60 = vunpack.c.l.b16 %v22
  %v61 = vunpack.c.l.b16 %v23
  %v62 = vunpack.c.l.b16 %v24
  %v63 = vunpack.c.l.b16 %v25
  %v64 = vunpack.c.l.b16 %v26
  %v65 = vunpack.c.l.b16 %v27
  %v66 = vunpack.c.l.b16 %v28
  %v67 = vunpack.c.l.b16 %v29
  %v68 = vunpack.c.l.b16 %v30
  %v69 = vunpack.c.l.b16 %v31
  %v70 = vpack.c.b16 %v55, %v54
  %v71 = vpack.c.b16 %v57, %v56
  %v72 = vpack.c.b16 %v59, %v58
  %v73 = vpack.c.b16 %v61, %v60
  %v74 = vpack.c.b16 %v63, %v62
  %v75 = vpack.c.b16 %v65, %v64
  %v76 = vpack.c.b16 %v67, %v66
  %v77 = vpack.c.b16 %v69, %v68
  %86 = vmatprep.subr.bf16.mxu0 0
  %87 = vmatpush1.bf16.msra.mxu0 %v70
  %88 = vmatprep.subr.bf16.mxu0 0
  %89 = vmatpush1.bf16.msra.mxu0 %v71
  %90 = vmatprep.subr.bf16.mxu0 0
  %91 = vmatpush1.bf16.msra.mxu0 %v72
  %92 = vmatprep.subr.bf16.mxu0 0
  %93 = vmatpush1.bf16.msra.mxu0 %v73
  %94 = vmatprep.subr.bf16.mxu0 0
  %95 = vmatpush1.bf16.msra.mxu0 %v74
  %96 = vmatprep.subr.bf16.mxu0 0
  %97 = vmatpush1.bf16.msra.mxu0 %v75
  %98 = vmatprep.subr.bf16.mxu0 0
  %99 = vmatpush1.bf16.msra.mxu0 %v76
  %100 = vmatprep.subr.bf16.mxu0 0
  %101 = vmatpush1.bf16.msra.mxu0 %v77
  %102 = vmatprep.subr.bf16.mxu0 0
  %103 = vmatpush1.bf16.msra.mxu0 0
  %104 = vmatprep.subr.bf16.mxu0 0
  %105 = vmatpush1.bf16.msra.mxu0 0
  %106 = vmatprep.subr.bf16.mxu0 0
  %107 = vmatpush1.bf16.msra.mxu0 0
  %108 = vmatprep.subr.bf16.mxu0 0
  %109 = vmatpush1.bf16.msra.mxu0 0
  %110 = vmatprep.subr.bf16.mxu0 0
  %111 = vmatpush1.bf16.msra.mxu0 0
  %112 = vmatprep.subr.bf16.mxu0 0
  %113 = vmatpush1.bf16.msra.mxu0 0
  %114 = vmatprep.subr.bf16.mxu0 0
  %115 = vmatpush1.bf16.msra.mxu0 0
  %116 = vmatprep.subr.bf16.mxu0 0
  %117 = vmatpush1.bf16.msra.mxu0 0
  %118 = vmatprep.mubr.bf16.mxu0 0
  %119 = vmatmul.mubr.bf16.gmra.mrb[0].mxu0 %v36
  %v120 = vpop.f32.mrb[0].mxu0
  %v121 = vadd.f32 0.0, %v120
  %v122 = vpop.f32.mrb[0].mxu0
  %v123 = vpop.f32.mrb[0].mxu0
  %v124 = vadd.f32 0.0, %v123
  %v125 = vpop.f32.mrb[0].mxu0
  %126 = vdwg.mxu0
  %v127 = vadd.f32 %v121, %v124
  %v128 = vrot.slane %v127, 4
  %v129 = vadd.f32 %v127, %v128
  %v130 = vrot.slane %v129, 2
  %v131 = vadd.f32 %v129, %v130
  %v132 = vrot.slane %v131, 1
  %v133 = vadd.f32 %v131, %v132
  %134 = vst [vmem:[%s2] sm:$0x1] %v133
  %v135 = vmul.f32 %v121, %v121
  %v136 = vmul.f32 %v124, %v124
  %v137 = vadd.f32 %v135, %v136
  %v138 = vrot.slane %v137, 4
  %v139 = vadd.f32 %v137, %v138
  %v140 = vrot.slane %v139, 2
  %v141 = vadd.f32 %v139, %v140
  %v142 = vrot.slane %v141, 1
  %v143 = vadd.f32 %v141, %v142
  %144 = vst [vmem:[%s3] sm:$0x1] %v143
  // Predicated region
  $region10: #{projection_head.2} parent=0 // pred_check
    _
  $region11: #{projection_head.2} parent=0 // pred_check_branch
    %146 = sbr.rel (0) target = $region13
  $region12: #{projection_head.2} parent=0 // pred_region
    _
  $region13: #{projection_head.2} parent=0 // pred_fallthru
    _
  // Predicated region
  $region14: #{projection_head.2} parent=0 // pred_check
    _
  $region15: #{projection_head.2} parent=0 // pred_check_branch
    %148 = sbr.rel (0) target = $region17
  $region16: #{projection_head.2} parent=0 // pred_region
    _
  $region17: #{projection_head.2} parent=0 // pred_fallthru
    _
  // Predicated region
  $region18: #{projection_head.2} parent=0 // pred_check
    _
  $region19: #{projection_head.2} parent=0 // pred_check_branch
    %150 = sbr.rel (0) target = $region21
  $region20: #{projection_head.2} parent=0 // pred_region
    _
  $region21: #{projection_head.2} parent=0 // pred_fallthru
    _
  // Predicated region
  $region22: #{projection_head.2} parent=0 // pred_check
    _
  $region23: #{projection_head.2} parent=0 // pred_check_branch
    %152 = sbr.rel (0) target = $region25
  $region24: #{projection_head.2} parent=0 // pred_region
    _
  $region25: #{projection_head.2} parent=0 // pred_fallthru
    _

// kernel: projection_head.3
$region0: #{projection_head.3}
  #allocation0 [shape = 'u32[]', space=smem, size = 0x4, offset = 0x4, fixed_abs, tag = 'smem constant byte address 0x4 - core index']
  #allocation1 [shape = 'u32[144,128]{1,0:T(1,128)}', space=vmem, size = 0x12000, scoped, tag = 'internal scratch']
  %s0 = inlined_call_operand.vmem [shape: bf16[16,128], index: 0, kind: input, shape index: {}]
  %s1 = inlined_call_operand.vmem [shape: bf16[128,128], index: 1, kind: input, shape index: {}]
  %s2 = inlined_call_operand.vmem [shape: f32[1,128], index: 2, kind: input, shape index: {}]
  %s3 = inlined_call_operand.vmem [shape: f32[1,128], index: 3, kind: input, shape index: {}]
  %s4 = inlined_call_operand.vmem [shape: f32[1,128], index: 4, kind: input, shape index: {}]
  %s5 = inlined_call_operand.vmem [shape: f32[1,128], index: 5, kind: input, shape index: {}]
  %s6 = inlined_call_operand.vmem [shape: bf16[128,128], index: 6, kind: input, shape index: {}]
  %s7 = inlined_call_operand.vmem [shape: f32[1,128], index: 7, kind: input, shape index: {}]
  %s8 = inlined_call_operand.vmem [shape: f32[16,128], index: 8, kind: output, shape index: {}]
  %s9 = sld [smem:[#allocation0]]
  $region42: #{projection_head.3} parent=0
    _
  %s11 = ssub.s32 1, %s9
  %s12 = scalar_select 0, %s11, %s9
  // Predicated region
  $region2: #{projection_head.3} parent=0 // pred_check
    _
  $region3: #{projection_head.3} parent=0 // pred_check_branch
    %14 = sbr.rel (0) target = $region5
  $region4: #{projection_head.3} parent=0 // pred_region
    _
  $region5: #{projection_head.3} parent=0 // pred_fallthru
    _
  // Predicated region
  $region6: #{projection_head.3} parent=0 // pred_check
    _
  $region7: #{projection_head.3} parent=0 // pred_check_branch
    %16 = sbr.rel (0) target = $region9
  $region8: #{projection_head.3} parent=0 // pred_region
    _
  $region9: #{projection_head.3} parent=0 // pred_fallthru
    _
  // Predicated region
  $region10: #{projection_head.3} parent=0 // pred_check
    _
  $region11: #{projection_head.3} parent=0 // pred_check_branch
    %18 = sbr.rel (0) target = $region13
  $region12: #{projection_head.3} parent=0 // pred_region
    _
  $region13: #{projection_head.3} parent=0 // pred_fallthru
    _
  // Predicated region
  $region14: #{projection_head.3} parent=0 // pred_check
    _
  $region15: #{projection_head.3} parent=0 // pred_check_branch
    %20 = sbr.rel (0) target = $region17
  $region16: #{projection_head.3} parent=0 // pred_region
    _
  $region17: #{projection_head.3} parent=0 // pred_fallthru
    _
  // Predicated region
  $region18: #{projection_head.3} parent=0 // pred_check
    _
  $region19: #{projection_head.3} parent=0 // pred_check_branch
    %22 = sbr.rel (0) target = $region21
  $region20: #{projection_head.3} parent=0 // pred_region
    _
  $region21: #{projection_head.3} parent=0 // pred_fallthru
    _
  // Predicated region
  $region22: #{projection_head.3} parent=0 // pred_check
    _
  $region23: #{projection_head.3} parent=0 // pred_check_branch
    %24 = sbr.rel (0) target = $region25
  $region24: #{projection_head.3} parent=0 // pred_region
    _
  $region25: #{projection_head.3} parent=0 // pred_fallthru
    _
  // Predicated region
  $region26: #{projection_head.3} parent=0 // pred_check
    _
  $region27: #{projection_head.3} parent=0 // pred_check_branch
    %26 = sbr.rel (0) target = $region29
  $region28: #{projection_head.3} parent=0 // pred_region
    _
  $region29: #{projection_head.3} parent=0 // pred_fallthru
    _
  // Predicated region
  $region30: #{projection_head.3} parent=0 // pred_check
    _
  $region31: #{projection_head.3} parent=0 // pred_check_branch
    %28 = sbr.rel (0) target = $region33
  $region32: #{projection_head.3} parent=0 // pred_region
    _
  $region33: #{projection_head.3} parent=0 // pred_fallthru
    _
  %v30 = vld [vmem:[%s2] sm:$0x1]
  %v31 = vadd.f32 %v30, 0.0
  %v32 = vmul.f32 %v31, 0.125
  %v33 = vld [vmem:[%s3] sm:$0x1]
  %v34 = vadd.f32 %v33, 0.0
  %v35 = vmul.f32 %v34, 0.125
  %v36 = vmul.f32 %v32, %v32
  %v37 = vsub.f32 %v35, %v36
  %v38 = vmax.f32 %v37, 0.0
  %v39 = vld [vmem:[%s4] sm:$0x1]
  %v40 = vadd.f32 %v38, 1e-05
  %v41 = vrsqrt.pop %v40
  %v42 = vmul.f32 %v39, %v41
  %v43 = vld [vmem:[%s5] sm:$0x1]
  %v44 = vmul.f32 %v32, %v42
  %v45 = vsub.f32 %v43, %v44
  %v46 = vld [vmem:[%s0] sm:$0xf]
  %v47 = vld [vmem:[%s0 + $0x4] sm:$0xf]
  %v48 = vld [vmem:[%s1] sm:$0xf]
  %v49 = vld [vmem:[%s1 + $0x4] sm:$0xf]
  %v50 = vld [vmem:[%s1 + $0x8] sm:$0xf]
  %v51 = vld [vmem:[%s1 + $0xc] sm:$0xf]
  %v52 = vld [vmem:[%s1 + $0x10] sm:$0xf]
  %v53 = vld [vmem:[%s1 + $0x14] sm:$0xf]
  %v54 = vld [vmem:[%s1 + $0x18] sm:$0xf]
  %v55 = vld [vmem:[%s1 + $0x1c] sm:$0xf]
  %v56 = vld [vmem:[%s1 + $0x20] sm:$0xf]
  %v57 = vld [vmem:[%s1 + $0x24] sm:$0xf]
  %v58 = vld [vmem:[%s1 + $0x28] sm:$0xf]
  %v59 = vld [vmem:[%s1 + $0x2c] sm:$0xf]
  %v60 = vld [vmem:[%s1 + $0x30] sm:$0xf]
  %v61 = vld [vmem:[%s1 + $0x34] sm:$0xf]
  %v62 = vld [vmem:[%s1 + $0x38] sm:$0xf]
  %v63 = vld [vmem:[%s1 + $0x3c] sm:$0xf]
  %v66 = vunpack.c.l.b16 %v46
  %v67 = vunpack.c.l.b16 %v47
  %v68 = vpack.c.b16 %v67, %v66
  %v86 = vunpack.c.l.b16 %v48
  %v87 = vunpack.c.l.b16 %v49
  %v88 = vunpack.c.l.b16 %v50
  %v89 = vunpack.c.l.b16 %v51
  %v90 = vunpack.c.l.b16 %v52
  %v91 = vunpack.c.l.b16 %v53
  %v92 = vunpack.c.l.b16 %v54
  %v93 = vunpack.c.l.b16 %v55
  %v94 = vunpack.c.l.b16 %v56
  %v95 = vunpack.c.l.b16 %v57
  %v96 = vunpack.c.l.b16 %v58
  %v97 = vunpack.c.l.b16 %v59
  %v98 = vunpack.c.l.b16 %v60
  %v99 = vunpack.c.l.b16 %v61
  %v100 = vunpack.c.l.b16 %v62
  %v101 = vunpack.c.l.b16 %v63
  %v102 = vpack.c.b16 %v87, %v86
  %v103 = vpack.c.b16 %v89, %v88
  %v104 = vpack.c.b16 %v91, %v90
  %v105 = vpack.c.b16 %v93, %v92
  %v106 = vpack.c.b16 %v95, %v94
  %v107 = vpack.c.b16 %v97, %v96
  %v108 = vpack.c.b16 %v99, %v98
  %v109 = vpack.c.b16 %v101, %v100
  %118 = vmatprep.subr.bf16.mxu0 0
  %119 = vmatpush1.bf16.msra.mxu0 %v102
  %120 = vmatprep.subr.bf16.mxu0 0
  %121 = vmatpush1.bf16.msra.mxu0 %v103
  %122 = vmatprep.subr.bf16.mxu0 0
  %123 = vmatpush1.bf16.msra.mxu0 %v104
  %124 = vmatprep.subr.bf16.mxu0 0
  %125 = vmatpush1.bf16.msra.mxu0 %v105
  %126 = vmatprep.subr.bf16.mxu0 0
  %127 = vmatpush1.bf16.msra.mxu0 %v106
  %128 = vmatprep.subr.bf16.mxu0 0
  %129 = vmatpush1.bf16.msra.mxu0 %v107
  %130 = vmatprep.subr.bf16.mxu0 0
  %131 = vmatpush1.bf16.msra.mxu0 %v108
  %132 = vmatprep.subr.bf16.mxu0 0
  %133 = vmatpush1.bf16.msra.mxu0 %v109
  %134 = vmatprep.subr.bf16.mxu0 0
  %135 = vmatpush1.bf16.msra.mxu0 0
  %136 = vmatprep.subr.bf16.mxu0 0
  %137 = vmatpush1.bf16.msra.mxu0 0
  %138 = vmatprep.subr.bf16.mxu0 0
  %139 = vmatpush1.bf16.msra.mxu0 0
  %140 = vmatprep.subr.bf16.mxu0 0
  %141 = vmatpush1.bf16.msra.mxu0 0
  %142 = vmatprep.subr.bf16.mxu0 0
  %143 = vmatpush1.bf16.msra.mxu0 0
  %144 = vmatprep.subr.bf16.mxu0 0
  %145 = vmatpush1.bf16.msra.mxu0 0
  %146 = vmatprep.subr.bf16.mxu0 0
  %147 = vmatpush1.bf16.msra.mxu0 0
  %148 = vmatprep.subr.bf16.mxu0 0
  %149 = vmatpush1.bf16.msra.mxu0 0
  %150 = vmatprep.mubr.bf16.mxu0 0
  %151 = vmatmul.mubr.bf16.gmra.mrb[0].mxu0 %v68
  %v152 = vpop.f32.mrb[0].mxu0
  %v153 = vadd.f32 0.0, %v152
  %v154 = vpop.f32.mrb[0].mxu0
  %v155 = vpop.f32.mrb[0].mxu0
  %v156 = vadd.f32 0.0, %v155
  %v157 = vpop.f32.mrb[0].mxu0
  %158 = vdwg.mxu0
  %v160 = vlaneseq
  %v161 = vshrl.u32 %v160, 7
  %v162 = vsub.s32 0, %v161
  %v163 = vrot.slane %v42, %v162
  %v165 = vmul.f32 %v153, %v163
  %v166 = vmul.f32 %v156, %v163
  %v168 = vlaneseq
  %v169 = vshrl.u32 %v168, 7
  %v170 = vsub.s32 0, %v169
  %v171 = vrot.slane %v45, %v170
  %v173 = vadd.f32 %v165, %v171
  %v174 = vadd.f32 %v166, %v171
  %v175 = vmax.f32 %v173, 0.0
  %v176 = vmax.f32 %v174, 0.0
  %v177 = vpack.c.bf16 %v176, %v175
  %v178 = vld [vmem:[%s6] sm:$0xf]
  %v179 = vld [vmem:[%s6 + $0x4] sm:$0xf]
  %v180 = vld [vmem:[%s6 + $0x8] sm:$0xf]
  %v181 = vld [vmem:[%s6 + $0xc] sm:$0xf]
  %v182 = vld [vmem:[%s6 + $0x10] sm:$0xf]
  %v183 = vld [vmem:[%s6 + $0x14] sm:$0xf]
  %v184 = vld [vmem:[%s6 + $0x18] sm:$0xf]
  %v185 = vld [vmem:[%s6 + $0x1c] sm:$0xf]
  %v186 = vld [vmem:[%s6 + $0x20] sm:$0xf]
  %v187 = vld [vmem:[%s6 + $0x24] sm:$0xf]
  %v188 = vld [vmem:[%s6 + $0x28] sm:$0xf]
  %v189 = vld [vmem:[%s6 + $0x2c] sm:$0xf]
  %v190 = vld [vmem:[%s6 + $0x30] sm:$0xf]
  %v191 = vld [vmem:[%s6 + $0x34] sm:$0xf]
  %v192 = vld [vmem:[%s6 + $0x38] sm:$0xf]
  %v193 = vld [vmem:[%s6 + $0x3c] sm:$0xf]
  %v194 = vld [vmem:[%s7] sm:$0x1]
  %v196 = vlaneseq
  %v197 = vshrl.u32 %v196, 7
  %v198 = vsub.s32 0, %v197
  %v199 = vrot.slane %v194, %v198
  %v217 = vunpack.c.l.b16 %v178
  %v218 = vunpack.c.l.b16 %v179
  %v219 = vunpack.c.l.b16 %v180
  %v220 = vunpack.c.l.b16 %v181
  %v221 = vunpack.c.l.b16 %v182
  %v222 = vunpack.c.l.b16 %v183
  %v223 = vunpack.c.l.b16 %v184
  %v224 = vunpack.c.l.b16 %v185
  %v225 = vunpack.c.l.b16 %v186
  %v226 = vunpack.c.l.b16 %v187
  %v227 = vunpack.c.l.b16 %v188
  %v228 = vunpack.c.l.b16 %v189
  %v229 = vunpack.c.l.b16 %v190
  %v230 = vunpack.c.l.b16 %v191
  %v231 = vunpack.c.l.b16 %v192
  %v232 = vunpack.c.l.b16 %v193
  %v233 = vpack.c.b16 %v218, %v217
  %v234 = vpack.c.b16 %v220, %v219
  %v235 = vpack.c.b16 %v222, %v221
  %v236 = vpack.c.b16 %v224, %v223
  %v237 = vpack.c.b16 %v226, %v225
  %v238 = vpack.c.b16 %v228, %v227
  %v239 = vpack.c.b16 %v230, %v229
  %v240 = vpack.c.b16 %v232, %v231
  %249 = vmatprep.subr.bf16.mxu0 0
  %250 = vmatpush1.bf16.msra.mxu0 %v233
  %251 = vmatprep.subr.bf16.mxu0 0
  %252 = vmatpush1.bf16.msra.mxu0 %v234
  %253 = vmatprep.subr.bf16.mxu0 0
  %254 = vmatpush1.bf16.msra.mxu0 %v235
  %255 = vmatprep.subr.bf16.mxu0 0
  %256 = vmatpush1.bf16.msra.mxu0 %v236
  %257 = vmatprep.subr.bf16.mxu0 0
  %258 = vmatpush1.bf16.msra.mxu0 %v237
  %259 = vmatprep.subr.bf16.mxu0 0
  %260 = vmatpush1.bf16.msra.mxu0 %v238
  %261 = vmatprep.subr.bf16.mxu0 0
  %262 = vmatpush1.bf16.msra.mxu0 %v239
  %263 = vmatprep.subr.bf16.mxu0 0
  %264 = vmatpush1.bf16.msra.mxu0 %v240
  %265 = vmatprep.subr.bf16.mxu0 0
  %266 = vmatpush1.bf16.msra.mxu0 0
  %267 = vmatprep.subr.bf16.mxu0 0
  %268 = vmatpush1.bf16.msra.mxu0 0
  %269 = vmatprep.subr.bf16.mxu0 0
  %270 = vmatpush1.bf16.msra.mxu0 0
  %271 = vmatprep.subr.bf16.mxu0 0
  %272 = vmatpush1.bf16.msra.mxu0 0
  %273 = vmatprep.subr.bf16.mxu0 0
  %274 = vmatpush1.bf16.msra.mxu0 0
  %275 = vmatprep.subr.bf16.mxu0 0
  %276 = vmatpush1.bf16.msra.mxu0 0
  %277 = vmatprep.subr.bf16.mxu0 0
  %278 = vmatpush1.bf16.msra.mxu0 0
  %279 = vmatprep.subr.bf16.mxu0 0
  %280 = vmatpush1.bf16.msra.mxu0 0
  %281 = vmatprep.mubr.bf16.mxu0 0
  %282 = vmatmul.mubr.bf16.gmra.mrb[0].mxu0 %v177
  %v283 = vpop.f32.mrb[0].mxu0
  %v284 = vadd.f32 %v199, %v283
  %v285 = vpop.f32.mrb[0].mxu0
  %v286 = vpop.f32.mrb[0].mxu0
  %v287 = vadd.f32 %v199, %v286
  %v288 = vpop.f32.mrb[0].mxu0
  %289 = vdwg.mxu0
  %290 = vst [vmem:[%s8] sm:$0xff] %v284
  %291 = vst [vmem:[%s8 + $0x8] sm:$0xff] %v287
  // Predicated region
  $region34: #{projection_head.3} parent=0 // pred_check
    _
  $region35: #{projection_head.3} parent=0 // pred_check_branch
    %293 = sbr.rel (0) target = $region37
  $region36: #{projection_head.3} parent=0 // pred_region
    _
  $region37: #{projection_head.3} parent=0 // pred_fallthru
    _
  // Predicated region
  $region38: #{projection_head.3} parent=0 // pred_check
    _
  $region39: #{projection_head.3} parent=0 // pred_check_branch
    %295 = sbr.rel (0) target = $region41
  $region40: #{projection_head.3} parent=0 // pred_region
    _
  $region41: #{projection_head.3} parent=0 // pred_fallthru
    _

</llo_original>
